<compile_context>
chip_gen: v6e
topology: v6e:2x2x1
jax: 0.10.0
libtpu: 0.0.40
codegen_flags: <defaults>
</compile_context>

<pallas_src>
import functools

import jax
import jax.numpy as jnp
from jax import lax
from jax.experimental import pallas as pl
from jax.experimental.pallas import tpu as pltpu


# ---------------------------------------------------------------------------
# prep kernel: normalize a row block of both views, emit bf16 z_aug = [z, 1],
# accumulate the positive-pair dot-product sum.
# ---------------------------------------------------------------------------
def _prep_kernel(emb_i_ref, emb_j_ref, z_ref, pos_ref):
    eps = 1e-12  # matches torch.nn.functional.normalize default eps
    zi = emb_i_ref[...].astype(jnp.float32)
    zj = emb_j_ref[...].astype(jnp.float32)

    # x / max(||x||, eps) == x * rsqrt(max(sumsq, eps^2))  (sqrt is monotone)
    zi = zi * lax.rsqrt(jnp.maximum(jnp.sum(zi * zi, axis=1, keepdims=True), eps * eps))
    zj = zj * lax.rsqrt(jnp.maximum(jnp.sum(zj * zj, axis=1, keepdims=True), eps * eps))

    @pl.when(pl.program_id(0) == 0)
    def _init():
        pos_ref[...] = jnp.zeros_like(pos_ref)

    # sum_b z_i[b] . z_j[b]   (positives for rows B..2B-1 are identical)
    pos_ref[...] += jnp.sum(zi * zj).reshape(1, 1)

    d = zi.shape[1]
    z_ref[0, :, :d] = zi.astype(jnp.bfloat16)
    z_ref[1, :, :d] = zj.astype(jnp.bfloat16)
    z_ref[0, :, d:] = jnp.ones((zi.shape[0], 1), jnp.bfloat16)
    z_ref[1, :, d:] = jnp.ones((zj.shape[0], 1), jnp.bfloat16)


# ---------------------------------------------------------------------------
# main kernel: one row tile of the similarity matrix -> partial sum of
# log-denominators.  The MXU matmul directly yields (sim - 1)/t (augmented
# column), the self entry is masked out with a diagonal select.
# ---------------------------------------------------------------------------
def _sim_row_kernel(z_ref, zt_ref, out_ref, *, tm, use_bf16_exp):
    arg = jnp.dot(z_ref[...], zt_ref[...], preferred_element_type=jnp.float32)  # [TM, 2B]

    row0 = pl.program_id(0) * tm
    col = lax.broadcasted_iota(jnp.int32, arg.shape, 1)
    row = lax.broadcasted_iota(jnp.int32, arg.shape, 0) + row0

    if use_bf16_exp:
        # Optional: bf16 EUP is ~2x faster on v6e/v7x (NOT v5e).  Off by default.
        e = jnp.exp(arg.astype(jnp.bfloat16)).astype(jnp.float32)
    else:
        e = jnp.exp(arg)
    e = jnp.where(col == row, 0.0, e)                          # mask self term

    denom = jnp.sum(e, axis=1, keepdims=True)                  # [TM, 1]
    out_ref[...] = jnp.full(out_ref.shape, jnp.sum(jnp.log(denom)), jnp.float32)


# ---------------------------------------------------------------------------
# sizing helpers
# ---------------------------------------------------------------------------
def _vmem_capacity_bytes():
    try:
        return int(pltpu.get_tpu_info().vmem_capacity_bytes)
    except Exception:
        return 64 << 20  # conservative: v7x per-core physical VMEM


def _main_vmem_estimate(tm, n2, d):
    zt_bytes = (d + 1) * n2 * 2          # resident bf16 zt (single-buffered)
    lhs_bytes = 2 * tm * (d + 1) * 2     # double-buffered bf16 row tile
    out_bytes = 2 * 1 * 128 * 4          # tiny partial-output blocks
    tmp_bytes = 4 * tm * n2 * 4          # sim/exp/iota/mask temporaries (f32)
    return zt_bytes + lhs_bytes + out_bytes + tmp_bytes


def _pick_tm(n2, d, budget):
    fallback = None
    for tm in (256, 128, 64, 32, 16, 8):
        if tm > n2 or n2 % tm:
            continue
        if fallback is None:
            fallback = tm
        if n2 // tm >= 2 and _main_vmem_estimate(tm, n2, d) <= budget:
            return tm
    return fallback if fallback is not None else n2


def _pick_tb(b, d):
    for tb in (256, 128, 64, 32, 16, 8):
        if tb <= b and b % tb == 0 and tb * (d + 1) * 40 <= (24 << 20):
            return tb
    return b


# ---------------------------------------------------------------------------
# wrapper
# ---------------------------------------------------------------------------
def infonce_loss(emb_i, emb_j, temperature=0.5, tm=None, use_bf16_exp=False):
    b, d = emb_i.shape
    n2 = 2 * b
    inv_t = 1.0 / float(temperature)

    # ---- prep: tiled normalize -> bf16 z_aug, + positive-pair sum ----------
    tb = _pick_tb(b, d)
    z3, pos_sum = pl.pallas_call(
        _prep_kernel,
        grid=(b // tb,),
        out_shape=(
            jax.ShapeDtypeStruct((2, b, d + 1), jnp.bfloat16),
            jax.ShapeDtypeStruct((1, 1), jnp.float32),
        ),
        in_specs=[
            pl.BlockSpec((tb, d), lambda i: (i, 0)),
            pl.BlockSpec((tb, d), lambda i: (i, 0)),
        ],
        out_specs=(
            pl.BlockSpec((2, tb, d + 1), lambda i: (0, i, 0)),
            pl.BlockSpec((1, 1), lambda i: (0, 0)),
        ),
        compiler_params=pltpu.CompilerParams(
            dimension_semantics=("arbitrary",),   # pos output is an accumulator
        ),
    )(emb_i, emb_j)

    # [z_i; z_j] by merging the leading dims (free row-major reshape).
    z_aug = z3.reshape(n2, d + 1)

    # Lane-dense, pre-transposed bf16 RHS with the (sim - 1)/t affine folded in:
    # rows 0..d-1 are z^T / t, the augmented row d is -1/t.
    col_scale = jnp.concatenate(
        [jnp.full((d,), inv_t, jnp.float32), jnp.full((1,), -inv_t, jnp.float32)]
    )
    zt = (z_aug.astype(jnp.float32) * col_scale[None, :]).T.astype(jnp.bfloat16)

    # ---- main: tiled similarity rows, parallel grid -------------------------
    vmem_cap = _vmem_capacity_bytes()
    if tm is None:
        tm = _pick_tm(n2, d, budget=(3 * vmem_cap) // 4)
    assert n2 % tm == 0
    grid = n2 // tm
    vmem_limit = int(
        max(32 << 20, min(_main_vmem_estimate(tm, n2, d) + (8 << 20), (9 * vmem_cap) // 10))
    )

    kernel = functools.partial(_sim_row_kernel, tm=tm, use_bf16_exp=use_bf16_exp)

    def _call(single_buffer_zt):
        zt_kwargs = {"pipeline_mode": pl.Buffered(1)} if single_buffer_zt else {}
        return pl.pallas_call(
            kernel,
            grid=(grid,),
            out_shape=jax.ShapeDtypeStruct((grid, 1, 128), jnp.float32),
            in_specs=[
                pl.BlockSpec((tm, d + 1), lambda i: (i, 0)),                 # row tile
                pl.BlockSpec((d + 1, n2), lambda i: (0, 0), **zt_kwargs),    # resident zt
            ],
            out_specs=pl.BlockSpec((1, 1, 128), lambda i: (i, 0, 0)),
            compiler_params=pltpu.CompilerParams(
                dimension_semantics=("parallel",),
                vmem_limit_bytes=vmem_limit,
            ),
        )(z_aug, zt)

    try:
        partials = _call(True)     # grid-invariant zt held single-buffered
    except Exception:
        partials = _call(False)    # fall back to default double-buffering

    # ---- tiny final combine --------------------------------------------------
    # loss = (1/2B) * sum_k [ log(denom_k) - pos_k/t ]
    #      = (1/2B) * [ sum_k log(denom'_k) + (1/t) * (2B - 2*P) ]
    log_denom_sum = jnp.sum(partials[:, 0, 0])
    pos = pos_sum[0, 0]
    loss = (log_denom_sum + inv_t * (n2 - 2.0 * pos)) / n2
    return loss


# ---------------------------------------------------------------------------
# pure-JAX reference (matches the PyTorch module)
# ---------------------------------------------------------------------------
def _reference_infonce(emb_i, emb_j, temperature=0.5):
    eps = 1e-12
    zi = emb_i / jnp.maximum(jnp.linalg.norm(emb_i, axis=1, keepdims=True), eps)
    zj = emb_j / jnp.maximum(jnp.linalg.norm(emb_j, axis=1, keepdims=True), eps)
    z = jnp.concatenate([zi, zj], axis=0)
    sim = z @ z.T
    b = emb_i.shape[0]
    pos = jnp.concatenate([jnp.diagonal(sim, b), jnp.diagonal(sim, -b)], axis=0)
    mask = 1.0 - jnp.eye(2 * b, dtype=jnp.float32)
    denom = jnp.sum(mask * jnp.exp(sim / temperature), axis=1)
    loss_partial = -jnp.log(jnp.exp(pos / temperature) / denom)
    return jnp.sum(loss_partial) / (2 * b)


if __name__ == "__main__":
    batch_size = 128   # 2B = 256 -> TM = 128, grid = (2,): exercises the tiling
    hidden = 32
    temperature = 0.5

    key = jax.random.PRNGKey(0)
    k_i, k_j = jax.random.split(key)
    emb_i = jax.random.normal(k_i, (batch_size, hidden), dtype=jnp.float32)
    emb_j = jax.random.normal(k_j, (batch_size, hidden), dtype=jnp.float32)

    loss = infonce_loss(emb_i, emb_j, temperature)
    jax.block_until_ready(loss)

    ref = _reference_infonce(emb_i, emb_j, temperature)
    # bf16 MXU operands (f32 accumulation): agrees to ~1e-3; use 1e-2 tolerance.
    assert jnp.allclose(loss, ref, atol=1e-2, rtol=1e-2), (loss, ref)

    print("KERNEL_OK")
</pallas_src>

<mosaic_0001>
module attributes {stable_mosaic.version = 11 : i64} {
  func.func @_prep_kernel(%arg0: i32, %arg1: memref<128x32xf32, #tpu.memory_space<vmem>>, %arg2: memref<128x32xf32, #tpu.memory_space<vmem>>, %arg3: memref<2x128x33xbf16, #tpu.memory_space<vmem>>, %arg4: memref<1x1xf32, #tpu.memory_space<vmem>>) attributes {dimension_semantics = [#tpu.dimension_semantics<arbitrary>], iteration_bounds = array<i64: 1>, scalar_prefetch = 0 : i64, scratch_operands = 0 : i64, tpu.core_type = #tpu.core_type<tc>, window_params = [{transform_indices = @transform_0, window_bounds = array<i64: 128, 32>}, {transform_indices = @transform_1, window_bounds = array<i64: 128, 32>}, {transform_indices = @transform_2, window_bounds = array<i64: 2, 128, 33>}, {pipeline_mode = #tpu.pipeline_mode<synchronous>, transform_indices = @transform_3, window_bounds = array<i64: 1, 1>}]} {
    %c0 = arith.constant 0 : index
    %c0_0 = arith.constant 0 : index
    %0 = vector.load %arg1[%c0, %c0_0] : memref<128x32xf32, #tpu.memory_space<vmem>>, vector<128x32xf32>
    %c0_1 = arith.constant 0 : index
    %c0_2 = arith.constant 0 : index
    %1 = vector.load %arg2[%c0_1, %c0_2] : memref<128x32xf32, #tpu.memory_space<vmem>>, vector<128x32xf32>
    %2 = arith.mulf %0, %0 : vector<128x32xf32>
    %cst = arith.constant dense<0.000000e+00> : vector<128xf32>
    %3 = vector.multi_reduction <add>, %2, %cst [1] : vector<128x32xf32> to vector<128xf32>
    %4 = vector.shape_cast %3 : vector<128xf32> to vector<128x1xf32>
    %cst_3 = arith.constant 1.000000e-24 : f32
    %5 = vector.broadcast %cst_3 : f32 to vector<128x1xf32>
    %6 = arith.maximumf %4, %5 : vector<128x1xf32>
    %7 = math.rsqrt %6 : vector<128x1xf32>
    %8 = vector.broadcast %7 : vector<128x1xf32> to vector<128x32xf32>
    %9 = arith.mulf %0, %8 : vector<128x32xf32>
    %10 = arith.mulf %1, %1 : vector<128x32xf32>
    %cst_4 = arith.constant dense<0.000000e+00> : vector<128xf32>
    %11 = vector.multi_reduction <add>, %10, %cst_4 [1] : vector<128x32xf32> to vector<128xf32>
    %12 = vector.shape_cast %11 : vector<128xf32> to vector<128x1xf32>
    %cst_5 = arith.constant 1.000000e-24 : f32
    %13 = vector.broadcast %cst_5 : f32 to vector<128x1xf32>
    %14 = arith.maximumf %12, %13 : vector<128x1xf32>
    %15 = math.rsqrt %14 : vector<128x1xf32>
    %16 = vector.broadcast %15 : vector<128x1xf32> to vector<128x32xf32>
    %17 = arith.mulf %1, %16 : vector<128x32xf32>
    %c0_i32 = arith.constant 0 : i32
    %18 = arith.cmpi eq, %arg0, %c0_i32 : i32
    %19 = arith.extui %18 : i1 to i32
    %c0_i32_6 = arith.constant 0 : i32
    %20 = arith.cmpi ne, %19, %c0_i32_6 : i32
    scf.if %20 {
      %cst_24 = arith.constant 0.000000e+00 : f32
      %46 = vector.broadcast %cst_24 : f32 to vector<1x1xf32>
      %c0_25 = arith.constant 0 : index
      %c0_26 = arith.constant 0 : index
      %47 = vector.load %arg4[%c0_25, %c0_26] : memref<1x1xf32, #tpu.memory_space<vmem>>, vector<1x1xf32>
      tpu.vector_store %arg4[%c0_25, %c0_26], %46 {strides = array<i32>} : memref<1x1xf32, #tpu.memory_space<vmem>>, vector<1x1xf32>,
    } else {
    }
    %c0_7 = arith.constant 0 : index
    %c0_8 = arith.constant 0 : index
    %21 = vector.load %arg4[%c0_7, %c0_8] : memref<1x1xf32, #tpu.memory_space<vmem>>, vector<1x1xf32>
    %22 = arith.mulf %9, %17 : vector<128x32xf32>
    %23 = vector.shape_cast %22 : vector<128x32xf32> to vector<1x128x32xf32>
    %cst_9 = arith.constant dense<0.000000e+00> : vector<1xf32>
    %24 = vector.multi_reduction <add>, %23, %cst_9 [1, 2] : vector<1x128x32xf32> to vector<1xf32>
    %25 = vector.shape_cast %24 : vector<1xf32> to vector<1x1x1xf32>
    %26 = vector.extract %25[0, 0, 0] : f32 from vector<1x1x1xf32>
    %27 = vector.broadcast %26 : f32 to vector<1x1xf32>
    %28 = arith.addf %21, %27 : vector<1x1xf32>
    %c0_10 = arith.constant 0 : index
    %c0_11 = arith.constant 0 : index
    %29 = vector.load %arg4[%c0_10, %c0_11] : memref<1x1xf32, #tpu.memory_space<vmem>>, vector<1x1xf32>
    tpu.vector_store %arg4[%c0_10, %c0_11], %28 {strides = array<i32>} : memref<1x1xf32, #tpu.memory_space<vmem>>, vector<1x1xf32>,
    %30 = arith.truncf %9 : vector<128x32xf32> to vector<128x32xbf16>
    %c0_12 = arith.constant 0 : index
    %c0_13 = arith.constant 0 : index
    %c0_14 = arith.constant 0 : index
    %31 = vector.load %arg3[%c0_12, %c0_13, %c0_14] : memref<2x128x33xbf16, #tpu.memory_space<vmem>>, vector<1x128x32xbf16>
    %32 = vector.shape_cast %31 : vector<1x128x32xbf16> to vector<128x32xbf16>
    %33 = vector.shape_cast %30 : vector<128x32xbf16> to vector<1x128x32xbf16>
    tpu.vector_store %arg3[%c0_12, %c0_13, %c0_14], %33 {strides = array<i32>} : memref<2x128x33xbf16, #tpu.memory_space<vmem>>, vector<1x128x32xbf16>,
    %34 = arith.truncf %17 : vector<128x32xf32> to vector<128x32xbf16>
    %c1 = arith.constant 1 : index
    %c0_15 = arith.constant 0 : index
    %c0_16 = arith.constant 0 : index
    %35 = vector.load %arg3[%c1, %c0_15, %c0_16] : memref<2x128x33xbf16, #tpu.memory_space<vmem>>, vector<1x128x32xbf16>
    %36 = vector.shape_cast %35 : vector<1x128x32xbf16> to vector<128x32xbf16>
    %37 = vector.shape_cast %34 : vector<128x32xbf16> to vector<1x128x32xbf16>
    tpu.vector_store %arg3[%c1, %c0_15, %c0_16], %37 {strides = array<i32>} : memref<2x128x33xbf16, #tpu.memory_space<vmem>>, vector<1x128x32xbf16>,
    %cst_17 = arith.constant 1.000000e+00 : bf16
    %38 = vector.broadcast %cst_17 : bf16 to vector<128x1xbf16>
    %c0_18 = arith.constant 0 : index
    %c0_19 = arith.constant 0 : index
    %c32 = arith.constant 32 : index
    %39 = vector.load %arg3[%c0_18, %c0_19, %c32] : memref<2x128x33xbf16, #tpu.memory_space<vmem>>, vector<1x128x1xbf16>
    %40 = vector.shape_cast %39 : vector<1x128x1xbf16> to vector<128x1xbf16>
    %41 = vector.shape_cast %38 : vector<128x1xbf16> to vector<1x128x1xbf16>
    tpu.vector_store %arg3[%c0_18, %c0_19, %c32], %41 {strides = array<i32>} : memref<2x128x33xbf16, #tpu.memory_space<vmem>>, vector<1x128x1xbf16>,
    %cst_20 = arith.constant 1.000000e+00 : bf16
    %42 = vector.broadcast %cst_20 : bf16 to vector<128x1xbf16>
    %c1_21 = arith.constant 1 : index
    %c0_22 = arith.constant 0 : index
    %c32_23 = arith.constant 32 : index
    %43 = vector.load %arg3[%c1_21, %c0_22, %c32_23] : memref<2x128x33xbf16, #tpu.memory_space<vmem>>, vector<1x128x1xbf16>
    %44 = vector.shape_cast %43 : vector<1x128x1xbf16> to vector<128x1xbf16>
    %45 = vector.shape_cast %42 : vector<128x1xbf16> to vector<1x128x1xbf16>
    tpu.vector_store %arg3[%c1_21, %c0_22, %c32_23], %45 {strides = array<i32>} : memref<2x128x33xbf16, #tpu.memory_space<vmem>>, vector<1x128x1xbf16>,
    return
  }
  func.func @transform_0(%arg0: i32) -> (i32, i32) {
    %c0_i32 = arith.constant 0 : i32
    %c0_i32_0 = arith.constant 0 : i32
    return %arg0, %c0_i32 : i32, i32
  }
  func.func @transform_1(%arg0: i32) -> (i32, i32) {
    %c0_i32 = arith.constant 0 : i32
    %c0_i32_0 = arith.constant 0 : i32
    return %arg0, %c0_i32 : i32, i32
  }
  func.func @transform_2(%arg0: i32) -> (i32, i32, i32) {
    %c0_i32 = arith.constant 0 : i32
    %c0_i32_0 = arith.constant 0 : i32
    %c0_i32_1 = arith.constant 0 : i32
    return %c0_i32, %arg0, %c0_i32_0 : i32, i32, i32
  }
  func.func @transform_3(%arg0: i32) -> (i32, i32) {
    %c0_i32 = arith.constant 0 : i32
    %c0_i32_0 = arith.constant 0 : i32
    %c0_i32_1 = arith.constant 0 : i32
    return %c0_i32, %c0_i32_0 : i32, i32
  }
}

</mosaic_0001>

<llo_original>
// kernel: tpu_custom_call.1
$region0: #{tpu_custom_call.1}
  #allocation0 [shape = 'u32[]', space=smem, size = 0x4, offset = 0x4, fixed_abs, tag = 'smem constant byte address 0x4 - core index']
  #allocation1 [shape = 'u32[144,128]{1,0:T(1,128)}', space=vmem, size = 0x12000, scoped, tag = 'internal scratch']
  %s0 = inlined_call_operand.vmem [shape: f32[128,32], index: 0, kind: input, shape index: {}]
  %s1 = inlined_call_operand.vmem [shape: f32[128,32], index: 1, kind: input, shape index: {}]
  %s2 = inlined_call_operand.vmem [shape: bf16[2,128,33], index: 2, kind: output, shape index: {0}]
  %s3 = inlined_call_operand.hbm [shape: f32[1,1], index: 3, kind: output, shape index: {1}]
  %4 = xla_tuple %s2, %s3
  %s5 = sld [smem:[#allocation0]]
  $region30: #{tpu_custom_call.1} parent=0
    _
  %s7 = ssub.s32 1, %s5
  %s8 = scalar_select 0, %s7, %s5
  $region1: #{tpu_custom_call.1} parent=0
    #allocation2 [shape = 'u8[512]{0}', space=vmem, size = 0x400, scoped, tag = 'output window, operand 1, single buffered']
    #allocation3 [shape = 's32[1]{0}', space=sflag, size = 0x4, scoped, tag = 'scoped memory for tpu_custom_call.1']
    %9 = vsyncpa [#allocation3], 0
    // Predicated region
    $region2: #{tpu_custom_call.1} parent=1 // pred_check
      _
    $region3: #{tpu_custom_call.1} parent=1 // pred_check_branch
      %11 = sbr.rel (0) target = $region5
    $region4: #{tpu_custom_call.1} parent=1 // pred_region
      _
    $region5: #{tpu_custom_call.1} parent=1 // pred_fallthru
      _
    // Predicated region
    $region6: #{tpu_custom_call.1} parent=1 // pred_check
      _
    $region7: #{tpu_custom_call.1} parent=1 // pred_check_branch
      %13 = sbr.rel (0) target = $region9
    $region8: #{tpu_custom_call.1} parent=1 // pred_region
      _
    $region9: #{tpu_custom_call.1} parent=1 // pred_fallthru
      _
    %v15 = vld [vmem:[%s0] sm:$0xff]
    %v16 = vld [vmem:[%s0 + $0x8] sm:$0xff]
    %v17 = vld [vmem:[%s0 + $0x10] sm:$0xff]
    %v18 = vld [vmem:[%s0 + $0x18] sm:$0xff]
    %v19 = vld [vmem:[%s0 + $0x20] sm:$0xff]
    %v20 = vld [vmem:[%s0 + $0x28] sm:$0xff]
    %v21 = vld [vmem:[%s0 + $0x30] sm:$0xff]
    %v22 = vld [vmem:[%s0 + $0x38] sm:$0xff]
    %v23 = vld [vmem:[%s0 + $0x40] sm:$0xff]
    %v24 = vld [vmem:[%s0 + $0x48] sm:$0xff]
    %v25 = vld [vmem:[%s0 + $0x50] sm:$0xff]
    %v26 = vld [vmem:[%s0 + $0x58] sm:$0xff]
    %v27 = vld [vmem:[%s0 + $0x60] sm:$0xff]
    %v28 = vld [vmem:[%s0 + $0x68] sm:$0xff]
    %v29 = vld [vmem:[%s0 + $0x70] sm:$0xff]
    %v30 = vld [vmem:[%s0 + $0x78] sm:$0xff]
    %v31 = vld [vmem:[%s1] sm:$0xff]
    %v32 = vld [vmem:[%s1 + $0x8] sm:$0xff]
    %v33 = vld [vmem:[%s1 + $0x10] sm:$0xff]
    %v34 = vld [vmem:[%s1 + $0x18] sm:$0xff]
    %v35 = vld [vmem:[%s1 + $0x20] sm:$0xff]
    %v36 = vld [vmem:[%s1 + $0x28] sm:$0xff]
    %v37 = vld [vmem:[%s1 + $0x30] sm:$0xff]
    %v38 = vld [vmem:[%s1 + $0x38] sm:$0xff]
    %v39 = vld [vmem:[%s1 + $0x40] sm:$0xff]
    %v40 = vld [vmem:[%s1 + $0x48] sm:$0xff]
    %v41 = vld [vmem:[%s1 + $0x50] sm:$0xff]
    %v42 = vld [vmem:[%s1 + $0x58] sm:$0xff]
    %v43 = vld [vmem:[%s1 + $0x60] sm:$0xff]
    %v44 = vld [vmem:[%s1 + $0x68] sm:$0xff]
    %v45 = vld [vmem:[%s1 + $0x70] sm:$0xff]
    %v46 = vld [vmem:[%s1 + $0x78] sm:$0xff]
    %v47 = vmul.f32 %v15, %v15
    %v48 = vmul.f32 %v16, %v16
    %v49 = vmul.f32 %v17, %v17
    %v50 = vmul.f32 %v18, %v18
    %v51 = vmul.f32 %v19, %v19
    %v52 = vmul.f32 %v20, %v20
    %v53 = vmul.f32 %v21, %v21
    %v54 = vmul.f32 %v22, %v22
    %v55 = vmul.f32 %v23, %v23
    %v56 = vmul.f32 %v24, %v24
    %v57 = vmul.f32 %v25, %v25
    %v58 = vmul.f32 %v26, %v26
    %v59 = vmul.f32 %v27, %v27
    %v60 = vmul.f32 %v28, %v28
    %v61 = vmul.f32 %v29, %v29
    %v62 = vmul.f32 %v30, %v30
    %vm63 = vcmask 261120
    %v64 = vsel %vm63, %v47, 0.0
    %65 = vadd.xlane.f32.xlu0 %v64
    %v66 = vpop.xlane.xlu0 %65
    %v67 = vsel %vm63, %v48, 0.0
    %68 = vadd.xlane.f32.xlu0 %v67
    %v69 = vpop.xlane.xlu0 %68
    %v70 = vsel %vm63, %v49, 0.0
    %71 = vadd.xlane.f32.xlu0 %v70
    %v72 = vpop.xlane.xlu0 %71
    %v73 = vsel %vm63, %v50, 0.0
    %74 = vadd.xlane.f32.xlu0 %v73
    %v75 = vpop.xlane.xlu0 %74
    %v76 = vsel %vm63, %v51, 0.0
    %77 = vadd.xlane.f32.xlu0 %v76
    %v78 = vpop.xlane.xlu0 %77
    %v79 = vsel %vm63, %v52, 0.0
    %80 = vadd.xlane.f32.xlu0 %v79
    %v81 = vpop.xlane.xlu0 %80
    %v82 = vsel %vm63, %v53, 0.0
    %83 = vadd.xlane.f32.xlu0 %v82
    %v84 = vpop.xlane.xlu0 %83
    %v85 = vsel %vm63, %v54, 0.0
    %86 = vadd.xlane.f32.xlu0 %v85
    %v87 = vpop.xlane.xlu0 %86
    %v88 = vsel %vm63, %v55, 0.0
    %89 = vadd.xlane.f32.xlu0 %v88
    %v90 = vpop.xlane.xlu0 %89
    %v91 = vsel %vm63, %v56, 0.0
    %92 = vadd.xlane.f32.xlu0 %v91
    %v93 = vpop.xlane.xlu0 %92
    %v94 = vsel %vm63, %v57, 0.0
    %95 = vadd.xlane.f32.xlu0 %v94
    %v96 = vpop.xlane.xlu0 %95
    %v97 = vsel %vm63, %v58, 0.0
    %98 = vadd.xlane.f32.xlu0 %v97
    %v99 = vpop.xlane.xlu0 %98
    %v100 = vsel %vm63, %v59, 0.0
    %101 = vadd.xlane.f32.xlu0 %v100
    %v102 = vpop.xlane.xlu0 %101
    %v103 = vsel %vm63, %v60, 0.0
    %104 = vadd.xlane.f32.xlu0 %v103
    %v105 = vpop.xlane.xlu0 %104
    %v106 = vsel %vm63, %v61, 0.0
    %107 = vadd.xlane.f32.xlu0 %v106
    %v108 = vpop.xlane.xlu0 %107
    %v109 = vsel %vm63, %v62, 0.0
    %110 = vadd.xlane.f32.xlu0 %v109
    %v111 = vpop.xlane.xlu0 %110
    %v112 = vmax.f32 %v66, 1e-24
    %v113 = vmax.f32 %v69, 1e-24
    %v114 = vmax.f32 %v72, 1e-24
    %v115 = vmax.f32 %v75, 1e-24
    %v116 = vmax.f32 %v78, 1e-24
    %v117 = vmax.f32 %v81, 1e-24
    %v118 = vmax.f32 %v84, 1e-24
    %v119 = vmax.f32 %v87, 1e-24
    %v120 = vmax.f32 %v90, 1e-24
    %v121 = vmax.f32 %v93, 1e-24
    %v122 = vmax.f32 %v96, 1e-24
    %v123 = vmax.f32 %v99, 1e-24
    %v124 = vmax.f32 %v102, 1e-24
    %v125 = vmax.f32 %v105, 1e-24
    %v126 = vmax.f32 %v108, 1e-24
    %v127 = vmax.f32 %v111, 1e-24
    %v128 = vrsqrt.pop %v112
    %v129 = vrsqrt.pop %v113
    %v130 = vrsqrt.pop %v114
    %v131 = vrsqrt.pop %v115
    %v132 = vrsqrt.pop %v116
    %v133 = vrsqrt.pop %v117
    %v134 = vrsqrt.pop %v118
    %v135 = vrsqrt.pop %v119
    %v136 = vrsqrt.pop %v120
    %v137 = vrsqrt.pop %v121
    %v138 = vrsqrt.pop %v122
    %v139 = vrsqrt.pop %v123
    %v140 = vrsqrt.pop %v124
    %v141 = vrsqrt.pop %v125
    %v142 = vrsqrt.pop %v126
    %v143 = vrsqrt.pop %v127
    %v144 = vmul.f32 %v15, %v128
    %v145 = vmul.f32 %v16, %v129
    %v146 = vmul.f32 %v17, %v130
    %v147 = vmul.f32 %v18, %v131
    %v148 = vmul.f32 %v19, %v132
    %v149 = vmul.f32 %v20, %v133
    %v150 = vmul.f32 %v21, %v134
    %v151 = vmul.f32 %v22, %v135
    %v152 = vmul.f32 %v23, %v136
    %v153 = vmul.f32 %v24, %v137
    %v154 = vmul.f32 %v25, %v138
    %v155 = vmul.f32 %v26, %v139
    %v156 = vmul.f32 %v27, %v140
    %v157 = vmul.f32 %v28, %v141
    %v158 = vmul.f32 %v29, %v142
    %v159 = vmul.f32 %v30, %v143
    %v160 = vmul.f32 %v31, %v31
    %v161 = vmul.f32 %v32, %v32
    %v162 = vmul.f32 %v33, %v33
    %v163 = vmul.f32 %v34, %v34
    %v164 = vmul.f32 %v35, %v35
    %v165 = vmul.f32 %v36, %v36
    %v166 = vmul.f32 %v37, %v37
    %v167 = vmul.f32 %v38, %v38
    %v168 = vmul.f32 %v39, %v39
    %v169 = vmul.f32 %v40, %v40
    %v170 = vmul.f32 %v41, %v41
    %v171 = vmul.f32 %v42, %v42
    %v172 = vmul.f32 %v43, %v43
    %v173 = vmul.f32 %v44, %v44
    %v174 = vmul.f32 %v45, %v45
    %v175 = vmul.f32 %v46, %v46
    %v176 = vsel %vm63, %v160, 0.0
    %177 = vadd.xlane.f32.xlu0 %v176
    %v178 = vpop.xlane.xlu0 %177
    %v179 = vsel %vm63, %v161, 0.0
    %180 = vadd.xlane.f32.xlu0 %v179
    %v181 = vpop.xlane.xlu0 %180
    %v182 = vsel %vm63, %v162, 0.0
    %183 = vadd.xlane.f32.xlu0 %v182
    %v184 = vpop.xlane.xlu0 %183
    %v185 = vsel %vm63, %v163, 0.0
    %186 = vadd.xlane.f32.xlu0 %v185
    %v187 = vpop.xlane.xlu0 %186
    %v188 = vsel %vm63, %v164, 0.0
    %189 = vadd.xlane.f32.xlu0 %v188
    %v190 = vpop.xlane.xlu0 %189
    %v191 = vsel %vm63, %v165, 0.0
    %192 = vadd.xlane.f32.xlu0 %v191
    %v193 = vpop.xlane.xlu0 %192
    %v194 = vsel %vm63, %v166, 0.0
    %195 = vadd.xlane.f32.xlu0 %v194
    %v196 = vpop.xlane.xlu0 %195
    %v197 = vsel %vm63, %v167, 0.0
    %198 = vadd.xlane.f32.xlu0 %v197
    %v199 = vpop.xlane.xlu0 %198
    %v200 = vsel %vm63, %v168, 0.0
    %201 = vadd.xlane.f32.xlu0 %v200
    %v202 = vpop.xlane.xlu0 %201
    %v203 = vsel %vm63, %v169, 0.0
    %204 = vadd.xlane.f32.xlu0 %v203
    %v205 = vpop.xlane.xlu0 %204
    %v206 = vsel %vm63, %v170, 0.0
    %207 = vadd.xlane.f32.xlu0 %v206
    %v208 = vpop.xlane.xlu0 %207
    %v209 = vsel %vm63, %v171, 0.0
    %210 = vadd.xlane.f32.xlu0 %v209
    %v211 = vpop.xlane.xlu0 %210
    %v212 = vsel %vm63, %v172, 0.0
    %213 = vadd.xlane.f32.xlu0 %v212
    %v214 = vpop.xlane.xlu0 %213
    %v215 = vsel %vm63, %v173, 0.0
    %216 = vadd.xlane.f32.xlu0 %v215
    %v217 = vpop.xlane.xlu0 %216
    %v218 = vsel %vm63, %v174, 0.0
    %219 = vadd.xlane.f32.xlu0 %v218
    %v220 = vpop.xlane.xlu0 %219
    %v221 = vsel %vm63, %v175, 0.0
    %222 = vadd.xlane.f32.xlu0 %v221
    %v223 = vpop.xlane.xlu0 %222
    %v224 = vmax.f32 %v178, 1e-24
    %v225 = vmax.f32 %v181, 1e-24
    %v226 = vmax.f32 %v184, 1e-24
    %v227 = vmax.f32 %v187, 1e-24
    %v228 = vmax.f32 %v190, 1e-24
    %v229 = vmax.f32 %v193, 1e-24
    %v230 = vmax.f32 %v196, 1e-24
    %v231 = vmax.f32 %v199, 1e-24
    %v232 = vmax.f32 %v202, 1e-24
    %v233 = vmax.f32 %v205, 1e-24
    %v234 = vmax.f32 %v208, 1e-24
    %v235 = vmax.f32 %v211, 1e-24
    %v236 = vmax.f32 %v214, 1e-24
    %v237 = vmax.f32 %v217, 1e-24
    %v238 = vmax.f32 %v220, 1e-24
    %v239 = vmax.f32 %v223, 1e-24
    %v240 = vrsqrt.pop %v224
    %v241 = vrsqrt.pop %v225
    %v242 = vrsqrt.pop %v226
    %v243 = vrsqrt.pop %v227
    %v244 = vrsqrt.pop %v228
    %v245 = vrsqrt.pop %v229
    %v246 = vrsqrt.pop %v230
    %v247 = vrsqrt.pop %v231
    %v248 = vrsqrt.pop %v232
    %v249 = vrsqrt.pop %v233
    %v250 = vrsqrt.pop %v234
    %v251 = vrsqrt.pop %v235
    %v252 = vrsqrt.pop %v236
    %v253 = vrsqrt.pop %v237
    %v254 = vrsqrt.pop %v238
    %v255 = vrsqrt.pop %v239
    %v256 = vmul.f32 %v31, %v240
    %v257 = vmul.f32 %v32, %v241
    %v258 = vmul.f32 %v33, %v242
    %v259 = vmul.f32 %v34, %v243
    %v260 = vmul.f32 %v35, %v244
    %v261 = vmul.f32 %v36, %v245
    %v262 = vmul.f32 %v37, %v246
    %v263 = vmul.f32 %v38, %v247
    %v264 = vmul.f32 %v39, %v248
    %v265 = vmul.f32 %v40, %v249
    %v266 = vmul.f32 %v41, %v250
    %v267 = vmul.f32 %v42, %v251
    %v268 = vmul.f32 %v43, %v252
    %v269 = vmul.f32 %v44, %v253
    %v270 = vmul.f32 %v45, %v254
    %v271 = vmul.f32 %v46, %v255
    %p272 = scmp.eq.s32.totalorder 0, 0
    // Predicated region
    $region10: #{tpu_custom_call.1} parent=1 // pred_check
      %p273 = pneg %p272
    $region11: #{tpu_custom_call.1} parent=1 // pred_check_branch
      %275 = sbr.rel (%p273) target = $region13
    $region12: #{tpu_custom_call.1} parent=1 // pred_region
      %vm276 = vcmask 0
      %277 = vst.msk [vmem:[#allocation2] sm:$0x1] %vm276, 0.0
    $region13: #{tpu_custom_call.1} parent=1 // pred_fallthru
      _
    %v278 = vld [vmem:[#allocation2] sm:$0x1]
    %v279 = vmul.f32 %v144, %v256
    %v280 = vmul.f32 %v145, %v257
    %v281 = vmul.f32 %v146, %v258
    %v282 = vmul.f32 %v147, %v259
    %v283 = vmul.f32 %v148, %v260
    %v284 = vmul.f32 %v149, %v261
    %v285 = vmul.f32 %v150, %v262
    %v286 = vmul.f32 %v151, %v263
    %v287 = vmul.f32 %v152, %v264
    %v288 = vmul.f32 %v153, %v265
    %v289 = vmul.f32 %v154, %v266
    %v290 = vmul.f32 %v155, %v267
    %v291 = vmul.f32 %v156, %v268
    %v292 = vmul.f32 %v157, %v269
    %v293 = vmul.f32 %v158, %v270
    %v294 = vmul.f32 %v159, %v271
    %v295 = vsel %vm63, %v279, 0.0
    %v296 = vsel %vm63, %v280, 0.0
    %v297 = vadd.f32 %v295, %v296
    %v298 = vsel %vm63, %v281, 0.0
    %v299 = vadd.f32 %v297, %v298
    %v300 = vsel %vm63, %v282, 0.0
    %v301 = vadd.f32 %v299, %v300
    %v302 = vsel %vm63, %v283, 0.0
    %v303 = vadd.f32 %v301, %v302
    %v304 = vsel %vm63, %v284, 0.0
    %v305 = vadd.f32 %v303, %v304
    %v306 = vsel %vm63, %v285, 0.0
    %v307 = vadd.f32 %v305, %v306
    %v308 = vsel %vm63, %v286, 0.0
    %v309 = vadd.f32 %v307, %v308
    %v310 = vsel %vm63, %v287, 0.0
    %v311 = vadd.f32 %v309, %v310
    %v312 = vsel %vm63, %v288, 0.0
    %v313 = vadd.f32 %v311, %v312
    %v314 = vsel %vm63, %v289, 0.0
    %v315 = vadd.f32 %v313, %v314
    %v316 = vsel %vm63, %v290, 0.0
    %v317 = vadd.f32 %v315, %v316
    %v318 = vsel %vm63, %v291, 0.0
    %v319 = vadd.f32 %v317, %v318
    %v320 = vsel %vm63, %v292, 0.0
    %v321 = vadd.f32 %v319, %v320
    %v322 = vsel %vm63, %v293, 0.0
    %v323 = vadd.f32 %v321, %v322
    %v324 = vsel %vm63, %v294, 0.0
    %v325 = vadd.f32 %v323, %v324
    %326 = vadd.xlane.f32.xlu0 %v325
    %v327 = vpop.xlane.xlu0 %326
    %v328 = vrot.slane %v327, 4
    %v329 = vadd.f32 %v327, %v328
    %v330 = vrot.slane %v329, 2
    %v331 = vadd.f32 %v329, %v330
    %v332 = vrot.slane %v331, 1
    %v333 = vadd.f32 %v331, %v332
    %s334 = vtos %v333
    %v335 = vstv %s334
    %v336 = vadd.f32 %v278, %v335
    %vm337 = vcmask 0
    %338 = vst.msk [vmem:[#allocation2] sm:$0x1] %vm337, %v336
    %v339 = vpack.c.bf16 %v145, %v144
    %v340 = vpack.c.bf16 %v147, %v146
    %v341 = vpack.c.bf16 %v149, %v148
    %v342 = vpack.c.bf16 %v151, %v150
    %v343 = vpack.c.bf16 %v153, %v152
    %v344 = vpack.c.bf16 %v155, %v154
    %v345 = vpack.c.bf16 %v157, %v156
    %v346 = vpack.c.bf16 %v159, %v158
    %v355 = vunpack.c.l.b16 %v339
    %v356 = vunpack.c.h.b16 %v339
    %v357 = vunpack.c.l.b16 %v340
    %v358 = vunpack.c.h.b16 %v340
    %v359 = vunpack.c.l.b16 %v341
    %v360 = vunpack.c.h.b16 %v341
    %v361 = vunpack.c.l.b16 %v342
    %v362 = vunpack.c.h.b16 %v342
    %v363 = vunpack.c.l.b16 %v343
    %v364 = vunpack.c.h.b16 %v343
    %v365 = vunpack.c.l.b16 %v344
    %v366 = vunpack.c.h.b16 %v344
    %v367 = vunpack.c.l.b16 %v345
    %v368 = vunpack.c.h.b16 %v345
    %v369 = vunpack.c.l.b16 %v346
    %v370 = vunpack.c.h.b16 %v346
    %v371 = vpack.c.b16 %v355, %v355
    %v372 = vpack.c.b16 %v356, %v356
    %v373 = vpack.c.b16 %v357, %v357
    %v374 = vpack.c.b16 %v358, %v358
    %v375 = vpack.c.b16 %v359, %v359
    %v376 = vpack.c.b16 %v360, %v360
    %v377 = vpack.c.b16 %v361, %v361
    %v378 = vpack.c.b16 %v362, %v362
    %v379 = vpack.c.b16 %v363, %v363
    %v380 = vpack.c.b16 %v364, %v364
    %v381 = vpack.c.b16 %v365, %v365
    %v382 = vpack.c.b16 %v366, %v366
    %v383 = vpack.c.b16 %v367, %v367
    %v384 = vpack.c.b16 %v368, %v368
    %v385 = vpack.c.b16 %v369, %v369
    %v386 = vpack.c.b16 %v370, %v370
    %vm403 = vcmask 257024
    %404 = vst.msk [vmem:[%s2] sm:$0xf] %vm403, %v371
    %405 = vst.msk [vmem:[%s2 + $0x4] sm:$0xf] %vm403, %v372
    %406 = vst.msk [vmem:[%s2 + $0x8] sm:$0xf] %vm403, %v373
    %407 = vst.msk [vmem:[%s2 + $0xc] sm:$0xf] %vm403, %v374
    %408 = vst.msk [vmem:[%s2 + $0x10] sm:$0xf] %vm403, %v375
    %409 = vst.msk [vmem:[%s2 + $0x14] sm:$0xf] %vm403, %v376
    %410 = vst.msk [vmem:[%s2 + $0x18] sm:$0xf] %vm403, %v377
    %411 = vst.msk [vmem:[%s2 + $0x1c] sm:$0xf] %vm403, %v378
    %412 = vst.msk [vmem:[%s2 + $0x20] sm:$0xf] %vm403, %v379
    %413 = vst.msk [vmem:[%s2 + $0x24] sm:$0xf] %vm403, %v380
    %414 = vst.msk [vmem:[%s2 + $0x28] sm:$0xf] %vm403, %v381
    %415 = vst.msk [vmem:[%s2 + $0x2c] sm:$0xf] %vm403, %v382
    %416 = vst.msk [vmem:[%s2 + $0x30] sm:$0xf] %vm403, %v383
    %417 = vst.msk [vmem:[%s2 + $0x34] sm:$0xf] %vm403, %v384
    %418 = vst.msk [vmem:[%s2 + $0x38] sm:$0xf] %vm403, %v385
    %419 = vst.msk [vmem:[%s2 + $0x3c] sm:$0xf] %vm403, %v386
    %v420 = vpack.c.bf16 %v257, %v256
    %v421 = vpack.c.bf16 %v259, %v258
    %v422 = vpack.c.bf16 %v261, %v260
    %v423 = vpack.c.bf16 %v263, %v262
    %v424 = vpack.c.bf16 %v265, %v264
    %v425 = vpack.c.bf16 %v267, %v266
    %v426 = vpack.c.bf16 %v269, %v268
    %v427 = vpack.c.bf16 %v271, %v270
    %v436 = vunpack.c.l.b16 %v420
    %v437 = vunpack.c.h.b16 %v420
    %v438 = vunpack.c.l.b16 %v421
    %v439 = vunpack.c.h.b16 %v421
    %v440 = vunpack.c.l.b16 %v422
    %v441 = vunpack.c.h.b16 %v422
    %v442 = vunpack.c.l.b16 %v423
    %v443 = vunpack.c.h.b16 %v423
    %v444 = vunpack.c.l.b16 %v424
    %v445 = vunpack.c.h.b16 %v424
    %v446 = vunpack.c.l.b16 %v425
    %v447 = vunpack.c.h.b16 %v425
    %v448 = vunpack.c.l.b16 %v426
    %v449 = vunpack.c.h.b16 %v426
    %v450 = vunpack.c.l.b16 %v427
    %v451 = vunpack.c.h.b16 %v427
    %v452 = vpack.c.b16 %v436, %v436
    %v453 = vpack.c.b16 %v437, %v437
    %v454 = vpack.c.b16 %v438, %v438
    %v455 = vpack.c.b16 %v439, %v439
    %v456 = vpack.c.b16 %v440, %v440
    %v457 = vpack.c.b16 %v441, %v441
    %v458 = vpack.c.b16 %v442, %v442
    %v459 = vpack.c.b16 %v443, %v443
    %v460 = vpack.c.b16 %v444, %v444
    %v461 = vpack.c.b16 %v445, %v445
    %v462 = vpack.c.b16 %v446, %v446
    %v463 = vpack.c.b16 %v447, %v447
    %v464 = vpack.c.b16 %v448, %v448
    %v465 = vpack.c.b16 %v449, %v449
    %v466 = vpack.c.b16 %v450, %v450
    %v467 = vpack.c.b16 %v451, %v451
    %s484 = scalar_lea.vmem %s2, 64
    %485 = vst.msk [vmem:[%s484] sm:$0xf] %vm403, %v452
    %486 = vst.msk [vmem:[%s484 + $0x4] sm:$0xf] %vm403, %v453
    %487 = vst.msk [vmem:[%s484 + $0x8] sm:$0xf] %vm403, %v454
    %488 = vst.msk [vmem:[%s484 + $0xc] sm:$0xf] %vm403, %v455
    %489 = vst.msk [vmem:[%s484 + $0x10] sm:$0xf] %vm403, %v456
    %490 = vst.msk [vmem:[%s484 + $0x14] sm:$0xf] %vm403, %v457
    %491 = vst.msk [vmem:[%s484 + $0x18] sm:$0xf] %vm403, %v458
    %492 = vst.msk [vmem:[%s484 + $0x1c] sm:$0xf] %vm403, %v459
    %493 = vst.msk [vmem:[%s484 + $0x20] sm:$0xf] %vm403, %v460
    %494 = vst.msk [vmem:[%s484 + $0x24] sm:$0xf] %vm403, %v461
    %495 = vst.msk [vmem:[%s484 + $0x28] sm:$0xf] %vm403, %v462
    %496 = vst.msk [vmem:[%s484 + $0x2c] sm:$0xf] %vm403, %v463
    %497 = vst.msk [vmem:[%s484 + $0x30] sm:$0xf] %vm403, %v464
    %498 = vst.msk [vmem:[%s484 + $0x34] sm:$0xf] %vm403, %v465
    %499 = vst.msk [vmem:[%s484 + $0x38] sm:$0xf] %vm403, %v466
    %500 = vst.msk [vmem:[%s484 + $0x3c] sm:$0xf] %vm403, %v467
    %vm501 = vcmask 265472
    %502 = vst.msk [vmem:[%s2] sm:$0xf] %vm501, 1065369472
    %503 = vst.msk [vmem:[%s2 + $0x4] sm:$0xf] %vm501, 1065369472
    %504 = vst.msk [vmem:[%s2 + $0x8] sm:$0xf] %vm501, 1065369472
    %505 = vst.msk [vmem:[%s2 + $0xc] sm:$0xf] %vm501, 1065369472
    %506 = vst.msk [vmem:[%s2 + $0x10] sm:$0xf] %vm501, 1065369472
    %507 = vst.msk [vmem:[%s2 + $0x14] sm:$0xf] %vm501, 1065369472
    %508 = vst.msk [vmem:[%s2 + $0x18] sm:$0xf] %vm501, 1065369472
    %509 = vst.msk [vmem:[%s2 + $0x1c] sm:$0xf] %vm501, 1065369472
    %510 = vst.msk [vmem:[%s2 + $0x20] sm:$0xf] %vm501, 1065369472
    %511 = vst.msk [vmem:[%s2 + $0x24] sm:$0xf] %vm501, 1065369472
    %512 = vst.msk [vmem:[%s2 + $0x28] sm:$0xf] %vm501, 1065369472
    %513 = vst.msk [vmem:[%s2 + $0x2c] sm:$0xf] %vm501, 1065369472
    %514 = vst.msk [vmem:[%s2 + $0x30] sm:$0xf] %vm501, 1065369472
    %515 = vst.msk [vmem:[%s2 + $0x34] sm:$0xf] %vm501, 1065369472
    %516 = vst.msk [vmem:[%s2 + $0x38] sm:$0xf] %vm501, 1065369472
    %517 = vst.msk [vmem:[%s2 + $0x3c] sm:$0xf] %vm501, 1065369472
    %518 = vst.msk [vmem:[%s484] sm:$0xf] %vm501, 1065369472
    %519 = vst.msk [vmem:[%s484 + $0x4] sm:$0xf] %vm501, 1065369472
    %520 = vst.msk [vmem:[%s484 + $0x8] sm:$0xf] %vm501, 1065369472
    %521 = vst.msk [vmem:[%s484 + $0xc] sm:$0xf] %vm501, 1065369472
    %522 = vst.msk [vmem:[%s484 + $0x10] sm:$0xf] %vm501, 1065369472
    %523 = vst.msk [vmem:[%s484 + $0x14] sm:$0xf] %vm501, 1065369472
    %524 = vst.msk [vmem:[%s484 + $0x18] sm:$0xf] %vm501, 1065369472
    %525 = vst.msk [vmem:[%s484 + $0x1c] sm:$0xf] %vm501, 1065369472
    %526 = vst.msk [vmem:[%s484 + $0x20] sm:$0xf] %vm501, 1065369472
    %527 = vst.msk [vmem:[%s484 + $0x24] sm:$0xf] %vm501, 1065369472
    %528 = vst.msk [vmem:[%s484 + $0x28] sm:$0xf] %vm501, 1065369472
    %529 = vst.msk [vmem:[%s484 + $0x2c] sm:$0xf] %vm501, 1065369472
    %530 = vst.msk [vmem:[%s484 + $0x30] sm:$0xf] %vm501, 1065369472
    %531 = vst.msk [vmem:[%s484 + $0x34] sm:$0xf] %vm501, 1065369472
    %532 = vst.msk [vmem:[%s484 + $0x38] sm:$0xf] %vm501, 1065369472
    %533 = vst.msk [vmem:[%s484 + $0x3c] sm:$0xf] %vm501, 1065369472
    // Predicated region
    $region14: #{tpu_custom_call.1} parent=1 // pred_check
      _
    $region15: #{tpu_custom_call.1} parent=1 // pred_check_branch
      %535 = sbr.rel (0) target = $region17
    $region16: #{tpu_custom_call.1} parent=1 // pred_region
      _
    $region17: #{tpu_custom_call.1} parent=1 // pred_fallthru
      _
    // Predicated region
    $region18: #{tpu_custom_call.1} parent=1 // pred_check
      _
    $region19: #{tpu_custom_call.1} parent=1 // pred_check_branch
      %537 = sbr.rel (0) target = $region21
    $region20: #{tpu_custom_call.1} parent=1 // pred_region
      %s539 = ssub.s32 16, 16
      %540 = vsyncadd [#allocation3], %s539
      %s542 = sshll.u32 [#allocation2], 4
      %s543 = int_to_ptr.vmem [resolvable:$true] %s542
      %545 = dma.vmem_to_hbm [thread:$0]  %s543, 16, %s3, [#allocation3]
    $region21: #{tpu_custom_call.1} parent=1 // pred_fallthru
      _
    // Predicated region
    $region22: #{tpu_custom_call.1} parent=1 // pred_check
      _
    $region23: #{tpu_custom_call.1} parent=1 // pred_check_branch
      %547 = sbr.rel (0) target = $region25
    $region24: #{tpu_custom_call.1} parent=1 // pred_region
      _
    $region25: #{tpu_custom_call.1} parent=1 // pred_fallthru
      _
    // Predicated region
    $region26: #{tpu_custom_call.1} parent=1 // pred_check
      _
    $region27: #{tpu_custom_call.1} parent=1 // pred_check_branch
      %549 = sbr.rel (0) target = $region29
    $region28: #{tpu_custom_call.1} parent=1 // pred_region
      %550 = dma.done [#allocation3], 16
    $region29: #{tpu_custom_call.1} parent=1 // pred_fallthru
      _
    %551 = vsyncpa [#allocation3], 1

</llo_original>
